<compile_context>
chip_gen: v6e
topology: v6e:2x2x1
jax: 0.10.0
libtpu: 0.0.40
codegen_flags: <defaults>
</compile_context>

<pallas_src>
import functools

import jax
import jax.numpy as jnp
from jax.experimental import pallas as pl
from jax.experimental.pallas import tpu as pltpu

_LANE = 128     # vreg lane width
_SUBLANE = 8    # vreg sublane depth (f32)


def _round_up(n, m):
    return ((n + m - 1) // m) * m


def actor_kernel(x_ref, w1_ref, b1_ref, w2_ref, b2_ref, w3_ref, b3_ref,
                 wmu_ref, bmu_ref, out_ref):
    """Fused 4-layer MLP (3x ReLU + tanh head) on one batch tile.

    Matmuls run on the MXU with f32 accumulation; bias add / ReLU / tanh are
    done on the f32 accumulator. If weights are bf16, activations are cast to
    bf16 right before each dot (bf16 MXU path on v6e/v7x), which is a no-op
    for f32 weights.
    """
    wdt = w1_ref.dtype
    x = x_ref[...].astype(wdt)

    h = jnp.dot(x, w1_ref[...], preferred_element_type=jnp.float32)
    h = jnp.maximum(h + b1_ref[...].astype(jnp.float32), 0.0)

    h = jnp.dot(h.astype(wdt), w2_ref[...], preferred_element_type=jnp.float32)
    h = jnp.maximum(h + b2_ref[...].astype(jnp.float32), 0.0)

    h = jnp.dot(h.astype(wdt), w3_ref[...], preferred_element_type=jnp.float32)
    h = jnp.maximum(h + b3_ref[...].astype(jnp.float32), 0.0)

    mu = jnp.dot(h.astype(wdt), wmu_ref[...], preferred_element_type=jnp.float32)
    mu = mu + bmu_ref[...].astype(jnp.float32)
    out_ref[...] = jnp.tanh(mu).astype(out_ref.dtype)


def _choose_batch_tile(B):
    """Auto-pick an MXU-friendly batch tile.

    - Small batches: one tile (rounded to the 8-row sublane granule).
    - Large batches: 128-256 rows per step, keeping >= 2 grid steps so the
      'parallel' axis can be sharded across v7x's two TensorCores.
    """
    bp = _round_up(max(B, 1), _SUBLANE)
    if bp < 2 * 128:
        return bp
    return min(256, _round_up((bp + 1) // 2, _SUBLANE))


@functools.partial(jax.jit, static_argnames=("batch_tile",))
def actor_forward(x, params, *, batch_tile=None):
    """x: (B, obs_dim) float32.  params: dict of (in,out) weights + (1,out) biases."""
    B, obs_dim = x.shape
    w1, b1 = params["w1"], params["b1"]
    w2, b2 = params["w2"], params["b2"]
    w3, b3 = params["w3"], params["b3"]
    wmu, bmu = params["wmu"], params["bmu"]
    hidden = w1.shape[1]
    n_actions = wmu.shape[1]

    if batch_tile is None:
        batch_tile = _choose_batch_tile(B)
    batch_tile = max(_SUBLANE, _round_up(int(batch_tile), _SUBLANE))

    # Ragged batch: zero-pad rows up to a tile multiple (grid = cdiv(B, tile)),
    # slice the padding off after the kernel.
    B_pad = _round_up(B, batch_tile)
    grid = (B_pad // batch_tile,)

    # Lane-dense feature padding (zeros keep the math exact):
    #   * obs_dim -> multiple of 128 (lane-dense x tile, full first-layer K)
    #   * n_actions -> multiple of 128 (unmasked stores, full last-layer N)
    obs_pad = _round_up(obs_dim, _LANE)
    act_pad = _round_up(n_actions, _LANE)

    xp = x.astype(jnp.float32)
    if (B_pad, obs_pad) != (B, obs_dim):
        xp = jnp.pad(xp, ((0, B_pad - B), (0, obs_pad - obs_dim)))
    w1p = jnp.pad(w1, ((0, obs_pad - obs_dim), (0, 0))) if obs_pad != obs_dim else w1
    wmup = jnp.pad(wmu, ((0, 0), (0, act_pad - n_actions))) if act_pad != n_actions else wmu
    bmup = jnp.pad(bmu, ((0, 0), (0, act_pad - n_actions))) if act_pad != n_actions else bmu

    # Weights/biases are small (<~1 MiB even padded) -> keep the full arrays
    # resident in VMEM with constant-index BlockSpecs; only the batch dim of
    # the activations moves with the grid.
    # (Double-buffering of these constant blocks wastes <1 MiB of VMEM; left
    #  at the default since it is negligible on all generations.)
    def full_spec(shape):
        return pl.BlockSpec(shape, lambda i: tuple(0 for _ in shape))

    out = pl.pallas_call(
        actor_kernel,
        out_shape=jax.ShapeDtypeStruct((B_pad, act_pad), jnp.float32),
        grid_spec=pltpu.PrefetchScalarGridSpec(
            num_scalar_prefetch=0,
            grid=grid,
            in_specs=[
                pl.BlockSpec((batch_tile, obs_pad), lambda i: (i, 0)),   # x tile
                full_spec((obs_pad, hidden)), full_spec((1, hidden)),    # fc1
                full_spec((hidden, hidden)), full_spec((1, hidden)),     # fc2
                full_spec((hidden, hidden)), full_spec((1, hidden)),     # fc3
                full_spec((hidden, act_pad)), full_spec((1, act_pad)),   # fc_mu (padded)
            ],
            out_specs=pl.BlockSpec((batch_tile, act_pad), lambda i: (i, 0)),
        ),
        compiler_params=pltpu.CompilerParams(
            dimension_semantics=("parallel",)),
    )(xp, w1p, b1, w2, b2, w3, b3, wmup, bmup)

    return out[:B, :n_actions]


def init_actor_params(key, obs_dim, n_actions, hidden=256, dtype=jnp.float32):
    """Deterministic PyTorch-style Kaiming-uniform init (U[-1/sqrt(fan_in), +]).

    Weights stored transposed as (in, out). Pass dtype=jnp.bfloat16 on v6e/v7x
    to use the bf16 MXU path (accumulation stays f32 in the kernel).
    """
    def linear_init(key, fan_in, fan_out):
        kw, kb = jax.random.split(key)
        bound = 1.0 / jnp.sqrt(fan_in)
        w = jax.random.uniform(kw, (fan_in, fan_out), jnp.float32, -bound, bound)
        b = jax.random.uniform(kb, (1, fan_out), jnp.float32, -bound, bound)
        return w.astype(dtype), b.astype(jnp.float32)

    k1, k2, k3, k4 = jax.random.split(key, 4)
    w1, b1 = linear_init(k1, obs_dim, hidden)
    w2, b2 = linear_init(k2, hidden, hidden)
    w3, b3 = linear_init(k3, hidden, hidden)
    wmu, bmu = linear_init(k4, hidden, n_actions)
    return {"w1": w1, "b1": b1, "w2": w2, "b2": b2,
            "w3": w3, "b3": b3, "wmu": wmu, "bmu": bmu}


def actor_forward_ref(x, params):
    """Pure-JAX reference for correctness checking."""
    f32 = lambda a: a.astype(jnp.float32)
    h = jax.nn.relu(x @ f32(params["w1"]) + params["b1"])
    h = jax.nn.relu(h @ f32(params["w2"]) + params["b2"])
    h = jax.nn.relu(h @ f32(params["w3"]) + params["b3"])
    return jnp.tanh(h @ f32(params["wmu"]) + params["bmu"])


if __name__ == "__main__":
    key = jax.random.PRNGKey(0)
    k_params, k_x1, k_x2 = jax.random.split(key, 3)

    obs_dim = 16       # flattened env.observation_space.shape
    n_actions = 8      # action dimension
    params = init_actor_params(k_params, obs_dim, n_actions)

    # Small batch (single tile, padded to sublane/lane granules).
    x_small = jax.random.normal(k_x1, (8, obs_dim), jnp.float32)
    out_small = jax.block_until_ready(actor_forward(x_small, params))
    ref_small = actor_forward_ref(x_small, params)
    assert out_small.shape == (8, n_actions)
    assert jnp.allclose(out_small, ref_small, atol=1e-4, rtol=1e-4), \
        "small-batch mismatch vs reference"

    # Larger, non-tile-multiple batch: exercises the auto tile (>=2 grid steps)
    # and the row-padding path.
    x_big = jax.random.normal(k_x2, (300, obs_dim), jnp.float32)
    out_big = jax.block_until_ready(actor_forward(x_big, params))
    ref_big = actor_forward_ref(x_big, params)
    assert out_big.shape == (300, n_actions)
    assert jnp.allclose(out_big, ref_big, atol=1e-4, rtol=1e-4), \
        "large-batch mismatch vs reference"

    print("KERNEL_OK")
</pallas_src>

<mosaic_0001>
module attributes {stable_mosaic.version = 11 : i64} {
  func.func @actor_kernel(%arg0: i32, %arg1: memref<8x128xf32, #tpu.memory_space<vmem>>, %arg2: memref<128x256xf32, #tpu.memory_space<vmem>>, %arg3: memref<1x256xf32, #tpu.memory_space<vmem>>, %arg4: memref<256x256xf32, #tpu.memory_space<vmem>>, %arg5: memref<1x256xf32, #tpu.memory_space<vmem>>, %arg6: memref<256x256xf32, #tpu.memory_space<vmem>>, %arg7: memref<1x256xf32, #tpu.memory_space<vmem>>, %arg8: memref<256x128xf32, #tpu.memory_space<vmem>>, %arg9: memref<1x128xf32, #tpu.memory_space<vmem>>, %arg10: memref<8x128xf32, #tpu.memory_space<vmem>>) attributes {dimension_semantics = [#tpu.dimension_semantics<parallel>], iteration_bounds = array<i64: 1>, scalar_prefetch = 0 : i64, scratch_operands = 0 : i64, tpu.core_type = #tpu.core_type<tc>, window_params = [{transform_indices = @transform_0, window_bounds = array<i64: 8, 128>}, {pipeline_mode = #tpu.pipeline_mode<synchronous>, transform_indices = @transform_1, window_bounds = array<i64: 128, 256>}, {pipeline_mode = #tpu.pipeline_mode<synchronous>, transform_indices = @transform_2, window_bounds = array<i64: 1, 256>}, {pipeline_mode = #tpu.pipeline_mode<synchronous>, transform_indices = @transform_3, window_bounds = array<i64: 256, 256>}, {pipeline_mode = #tpu.pipeline_mode<synchronous>, transform_indices = @transform_4, window_bounds = array<i64: 1, 256>}, {pipeline_mode = #tpu.pipeline_mode<synchronous>, transform_indices = @transform_5, window_bounds = array<i64: 256, 256>}, {pipeline_mode = #tpu.pipeline_mode<synchronous>, transform_indices = @transform_6, window_bounds = array<i64: 1, 256>}, {pipeline_mode = #tpu.pipeline_mode<synchronous>, transform_indices = @transform_7, window_bounds = array<i64: 256, 128>}, {pipeline_mode = #tpu.pipeline_mode<synchronous>, transform_indices = @transform_8, window_bounds = array<i64: 1, 128>}, {transform_indices = @transform_9, window_bounds = array<i64: 8, 128>}]} {
    %c0 = arith.constant 0 : index
    %c0_0 = arith.constant 0 : index
    %0 = vector.load %arg1[%c0, %c0_0] : memref<8x128xf32, #tpu.memory_space<vmem>>, vector<8x128xf32>
    %c0_1 = arith.constant 0 : index
    %c0_2 = arith.constant 0 : index
    %1 = vector.load %arg2[%c0_1, %c0_2] : memref<128x256xf32, #tpu.memory_space<vmem>>, vector<128x256xf32>
    %cst = arith.constant dense<0.000000e+00> : vector<8x256xf32>
    %2 = tpu.matmul %0, %1, %cst {dimension_numbers = #tpu.dot_dimension_numbers<[1], [0], [0], [1], [0, 0, 1, 1], [], []>} : vector<8x128xf32>, vector<128x256xf32>, vector<8x256xf32> -> vector<8x256xf32>
    %c0_3 = arith.constant 0 : index
    %c0_4 = arith.constant 0 : index
    %3 = vector.load %arg3[%c0_3, %c0_4] : memref<1x256xf32, #tpu.memory_space<vmem>>, vector<1x256xf32>
    %4 = vector.broadcast %3 : vector<1x256xf32> to vector<8x256xf32>
    %5 = arith.addf %2, %4 : vector<8x256xf32>
    %cst_5 = arith.constant 0.000000e+00 : f32
    %6 = vector.broadcast %cst_5 : f32 to vector<8x256xf32>
    %7 = arith.maximumf %5, %6 : vector<8x256xf32>
    %c0_6 = arith.constant 0 : index
    %c0_7 = arith.constant 0 : index
    %8 = vector.load %arg4[%c0_6, %c0_7] : memref<256x256xf32, #tpu.memory_space<vmem>>, vector<256x256xf32>
    %cst_8 = arith.constant dense<0.000000e+00> : vector<8x256xf32>
    %9 = tpu.matmul %7, %8, %cst_8 {dimension_numbers = #tpu.dot_dimension_numbers<[1], [0], [0], [1], [0, 0, 1, 1], [], []>} : vector<8x256xf32>, vector<256x256xf32>, vector<8x256xf32> -> vector<8x256xf32>
    %c0_9 = arith.constant 0 : index
    %c0_10 = arith.constant 0 : index
    %10 = vector.load %arg5[%c0_9, %c0_10] : memref<1x256xf32, #tpu.memory_space<vmem>>, vector<1x256xf32>
    %11 = vector.broadcast %10 : vector<1x256xf32> to vector<8x256xf32>
    %12 = arith.addf %9, %11 : vector<8x256xf32>
    %cst_11 = arith.constant 0.000000e+00 : f32
    %13 = vector.broadcast %cst_11 : f32 to vector<8x256xf32>
    %14 = arith.maximumf %12, %13 : vector<8x256xf32>
    %c0_12 = arith.constant 0 : index
    %c0_13 = arith.constant 0 : index
    %15 = vector.load %arg6[%c0_12, %c0_13] : memref<256x256xf32, #tpu.memory_space<vmem>>, vector<256x256xf32>
    %cst_14 = arith.constant dense<0.000000e+00> : vector<8x256xf32>
    %16 = tpu.matmul %14, %15, %cst_14 {dimension_numbers = #tpu.dot_dimension_numbers<[1], [0], [0], [1], [0, 0, 1, 1], [], []>} : vector<8x256xf32>, vector<256x256xf32>, vector<8x256xf32> -> vector<8x256xf32>
    %c0_15 = arith.constant 0 : index
    %c0_16 = arith.constant 0 : index
    %17 = vector.load %arg7[%c0_15, %c0_16] : memref<1x256xf32, #tpu.memory_space<vmem>>, vector<1x256xf32>
    %18 = vector.broadcast %17 : vector<1x256xf32> to vector<8x256xf32>
    %19 = arith.addf %16, %18 : vector<8x256xf32>
    %cst_17 = arith.constant 0.000000e+00 : f32
    %20 = vector.broadcast %cst_17 : f32 to vector<8x256xf32>
    %21 = arith.maximumf %19, %20 : vector<8x256xf32>
    %c0_18 = arith.constant 0 : index
    %c0_19 = arith.constant 0 : index
    %22 = vector.load %arg8[%c0_18, %c0_19] : memref<256x128xf32, #tpu.memory_space<vmem>>, vector<256x128xf32>
    %cst_20 = arith.constant dense<0.000000e+00> : vector<8x128xf32>
    %23 = tpu.matmul %21, %22, %cst_20 {dimension_numbers = #tpu.dot_dimension_numbers<[1], [0], [0], [1], [0, 0, 1, 1], [], []>} : vector<8x256xf32>, vector<256x128xf32>, vector<8x128xf32> -> vector<8x128xf32>
    %c0_21 = arith.constant 0 : index
    %c0_22 = arith.constant 0 : index
    %24 = vector.load %arg9[%c0_21, %c0_22] : memref<1x128xf32, #tpu.memory_space<vmem>>, vector<1x128xf32>
    %25 = vector.broadcast %24 : vector<1x128xf32> to vector<8x128xf32>
    %26 = arith.addf %23, %25 : vector<8x128xf32>
    %27 = math.tanh %26 : vector<8x128xf32>
    %c0_23 = arith.constant 0 : index
    %c0_24 = arith.constant 0 : index
    %28 = vector.load %arg10[%c0_23, %c0_24] : memref<8x128xf32, #tpu.memory_space<vmem>>, vector<8x128xf32>
    tpu.vector_store %arg10[%c0_23, %c0_24], %27 {strides = array<i32>} : memref<8x128xf32, #tpu.memory_space<vmem>>, vector<8x128xf32>,
    return
  }
  func.func @transform_0(%arg0: i32) -> (i32, i32) {
    %c0_i32 = arith.constant 0 : i32
    %c0_i32_0 = arith.constant 0 : i32
    return %arg0, %c0_i32 : i32, i32
  }
  func.func @transform_1(%arg0: i32) -> (i32, i32) {
    %c0_i32 = arith.constant 0 : i32
    %c0_i32_0 = arith.constant 0 : i32
    %c0_i32_1 = arith.constant 0 : i32
    return %c0_i32, %c0_i32_0 : i32, i32
  }
  func.func @transform_2(%arg0: i32) -> (i32, i32) {
    %c0_i32 = arith.constant 0 : i32
    %c0_i32_0 = arith.constant 0 : i32
    %c0_i32_1 = arith.constant 0 : i32
    return %c0_i32, %c0_i32_0 : i32, i32
  }
  func.func @transform_3(%arg0: i32) -> (i32, i32) {
    %c0_i32 = arith.constant 0 : i32
    %c0_i32_0 = arith.constant 0 : i32
    %c0_i32_1 = arith.constant 0 : i32
    return %c0_i32, %c0_i32_0 : i32, i32
  }
  func.func @transform_4(%arg0: i32) -> (i32, i32) {
    %c0_i32 = arith.constant 0 : i32
    %c0_i32_0 = arith.constant 0 : i32
    %c0_i32_1 = arith.constant 0 : i32
    return %c0_i32, %c0_i32_0 : i32, i32
  }
  func.func @transform_5(%arg0: i32) -> (i32, i32) {
    %c0_i32 = arith.constant 0 : i32
    %c0_i32_0 = arith.constant 0 : i32
    %c0_i32_1 = arith.constant 0 : i32
    return %c0_i32, %c0_i32_0 : i32, i32
  }
  func.func @transform_6(%arg0: i32) -> (i32, i32) {
    %c0_i32 = arith.constant 0 : i32
    %c0_i32_0 = arith.constant 0 : i32
    %c0_i32_1 = arith.constant 0 : i32
    return %c0_i32, %c0_i32_0 : i32, i32
  }
  func.func @transform_7(%arg0: i32) -> (i32, i32) {
    %c0_i32 = arith.constant 0 : i32
    %c0_i32_0 = arith.constant 0 : i32
    %c0_i32_1 = arith.constant 0 : i32
    return %c0_i32, %c0_i32_0 : i32, i32
  }
  func.func @transform_8(%arg0: i32) -> (i32, i32) {
    %c0_i32 = arith.constant 0 : i32
    %c0_i32_0 = arith.constant 0 : i32
    %c0_i32_1 = arith.constant 0 : i32
    return %c0_i32, %c0_i32_0 : i32, i32
  }
  func.func @transform_9(%arg0: i32) -> (i32, i32) {
    %c0_i32 = arith.constant 0 : i32
    %c0_i32_0 = arith.constant 0 : i32
    return %arg0, %c0_i32 : i32, i32
  }
}

</mosaic_0001>

<llo_original>
// kernel: actor_forward.1
$region0: #{actor_forward.1}
  #allocation0 [shape = 'u32[]', space=smem, size = 0x4, offset = 0x4, fixed_abs, tag = 'smem constant byte address 0x4 - core index']
  #allocation1 [shape = 'u32[144,128]{1,0:T(1,128)}', space=vmem, size = 0x12000, scoped, tag = 'internal scratch']
  %s0 = inlined_call_operand.vmem [shape: f32[8,128], index: 0, kind: input, shape index: {}]
  %s1 = inlined_call_operand.vmem [shape: f32[128,256], index: 1, kind: input, shape index: {}]
  %s2 = inlined_call_operand.vmem [shape: f32[1,256], index: 2, kind: input, shape index: {}]
  %s3 = inlined_call_operand.vmem [shape: f32[256,256], index: 3, kind: input, shape index: {}]
  %s4 = inlined_call_operand.vmem [shape: f32[1,256], index: 4, kind: input, shape index: {}]
  %s5 = inlined_call_operand.vmem [shape: f32[256,256], index: 5, kind: input, shape index: {}]
  %s6 = inlined_call_operand.vmem [shape: f32[1,256], index: 6, kind: input, shape index: {}]
  %s7 = inlined_call_operand.vmem [shape: f32[256,128], index: 7, kind: input, shape index: {}]
  %s8 = inlined_call_operand.vmem [shape: f32[1,128], index: 8, kind: input, shape index: {}]
  %s9 = inlined_call_operand.hbm [shape: f32[8,128], index: 9, kind: output, shape index: {}]
  %s10 = sld [smem:[#allocation0]]
  $region46: #{actor_forward.1} parent=0
    _
  %s12 = ssub.s32 1, %s10
  %s13 = scalar_select 0, %s12, %s10
  $region1: #{actor_forward.1} parent=0
    #allocation2 [shape = 'u8[4096]{0}', space=vmem, size = 0x1000, scoped, tag = 'output window, operand 0, single buffered']
    #allocation3 [shape = 's32[1]{0}', space=sflag, size = 0x4, scoped, tag = 'scoped memory for actor_forward.1']
    %14 = vsyncpa [#allocation3], 0
    // Predicated region
    $region2: #{actor_forward.1} parent=1 // pred_check
      _
    $region3: #{actor_forward.1} parent=1 // pred_check_branch
      %16 = sbr.rel (0) target = $region5
    $region4: #{actor_forward.1} parent=1 // pred_region
      _
    $region5: #{actor_forward.1} parent=1 // pred_fallthru
      _
    // Predicated region
    $region6: #{actor_forward.1} parent=1 // pred_check
      _
    $region7: #{actor_forward.1} parent=1 // pred_check_branch
      %18 = sbr.rel (0) target = $region9
    $region8: #{actor_forward.1} parent=1 // pred_region
      _
    $region9: #{actor_forward.1} parent=1 // pred_fallthru
      _
    // Predicated region
    $region10: #{actor_forward.1} parent=1 // pred_check
      _
    $region11: #{actor_forward.1} parent=1 // pred_check_branch
      %20 = sbr.rel (0) target = $region13
    $region12: #{actor_forward.1} parent=1 // pred_region
      _
    $region13: #{actor_forward.1} parent=1 // pred_fallthru
      _
    // Predicated region
    $region14: #{actor_forward.1} parent=1 // pred_check
      _
    $region15: #{actor_forward.1} parent=1 // pred_check_branch
      %22 = sbr.rel (0) target = $region17
    $region16: #{actor_forward.1} parent=1 // pred_region
      _
    $region17: #{actor_forward.1} parent=1 // pred_fallthru
      _
    // Predicated region
    $region18: #{actor_forward.1} parent=1 // pred_check
      _
    $region19: #{actor_forward.1} parent=1 // pred_check_branch
      %24 = sbr.rel (0) target = $region21
    $region20: #{actor_forward.1} parent=1 // pred_region
      _
    $region21: #{actor_forward.1} parent=1 // pred_fallthru
      _
    // Predicated region
    $region22: #{actor_forward.1} parent=1 // pred_check
      _
    $region23: #{actor_forward.1} parent=1 // pred_check_branch
      %26 = sbr.rel (0) target = $region25
    $region24: #{actor_forward.1} parent=1 // pred_region
      _
    $region25: #{actor_forward.1} parent=1 // pred_fallthru
      _
    // Predicated region
    $region26: #{actor_forward.1} parent=1 // pred_check
      _
    $region27: #{actor_forward.1} parent=1 // pred_check_branch
      %28 = sbr.rel (0) target = $region29
    $region28: #{actor_forward.1} parent=1 // pred_region
      _
    $region29: #{actor_forward.1} parent=1 // pred_fallthru
      _
    // Predicated region
    $region30: #{actor_forward.1} parent=1 // pred_check
      _
    $region31: #{actor_forward.1} parent=1 // pred_check_branch
      %30 = sbr.rel (0) target = $region33
    $region32: #{actor_forward.1} parent=1 // pred_region
      _
    $region33: #{actor_forward.1} parent=1 // pred_fallthru
      _
    // Predicated region
    $region34: #{actor_forward.1} parent=1 // pred_check
      _
    $region35: #{actor_forward.1} parent=1 // pred_check_branch
      %32 = sbr.rel (0) target = $region37
    $region36: #{actor_forward.1} parent=1 // pred_region
      _
    $region37: #{actor_forward.1} parent=1 // pred_fallthru
      _
    %v33 = vld [vmem:[%s0] sm:$0xff]
    %v34 = vld [vmem:[%s1] sm:$0xff]
    %v35 = vld [vmem:[%s1 + $0x8] sm:$0xff]
    %v36 = vld [vmem:[%s1 + $0x10] sm:$0xff]
    %v37 = vld [vmem:[%s1 + $0x18] sm:$0xff]
    %v38 = vld [vmem:[%s1 + $0x20] sm:$0xff]
    %v39 = vld [vmem:[%s1 + $0x28] sm:$0xff]
    %v40 = vld [vmem:[%s1 + $0x30] sm:$0xff]
    %v41 = vld [vmem:[%s1 + $0x38] sm:$0xff]
    %v42 = vld [vmem:[%s1 + $0x40] sm:$0xff]
    %v43 = vld [vmem:[%s1 + $0x48] sm:$0xff]
    %v44 = vld [vmem:[%s1 + $0x50] sm:$0xff]
    %v45 = vld [vmem:[%s1 + $0x58] sm:$0xff]
    %v46 = vld [vmem:[%s1 + $0x60] sm:$0xff]
    %v47 = vld [vmem:[%s1 + $0x68] sm:$0xff]
    %v48 = vld [vmem:[%s1 + $0x70] sm:$0xff]
    %v49 = vld [vmem:[%s1 + $0x78] sm:$0xff]
    %v50 = vld [vmem:[%s1 + $0x80] sm:$0xff]
    %v51 = vld [vmem:[%s1 + $0x88] sm:$0xff]
    %v52 = vld [vmem:[%s1 + $0x90] sm:$0xff]
    %v53 = vld [vmem:[%s1 + $0x98] sm:$0xff]
    %v54 = vld [vmem:[%s1 + $0xa0] sm:$0xff]
    %v55 = vld [vmem:[%s1 + $0xa8] sm:$0xff]
    %v56 = vld [vmem:[%s1 + $0xb0] sm:$0xff]
    %v57 = vld [vmem:[%s1 + $0xb8] sm:$0xff]
    %v58 = vld [vmem:[%s1 + $0xc0] sm:$0xff]
    %v59 = vld [vmem:[%s1 + $0xc8] sm:$0xff]
    %v60 = vld [vmem:[%s1 + $0xd0] sm:$0xff]
    %v61 = vld [vmem:[%s1 + $0xd8] sm:$0xff]
    %v62 = vld [vmem:[%s1 + $0xe0] sm:$0xff]
    %v63 = vld [vmem:[%s1 + $0xe8] sm:$0xff]
    %v64 = vld [vmem:[%s1 + $0xf0] sm:$0xff]
    %v65 = vld [vmem:[%s1 + $0xf8] sm:$0xff]
    %v66 = vld [vmem:[%s2] sm:$0x3]
    %v68 = vlaneseq
    %v69 = vshrl.u32 %v68, 7
    %v70 = vsub.s32 0, %v69
    %v71 = vrot.slane %v66, %v70
    %v72 = vlaneseq
    %v73 = vshrl.u32 %v72, 7
    %v74 = vsub.s32 1, %v73
    %v75 = vrot.slane %v66, %v74
    %78 = vmatprep.subr.mxu0 %v65
    %79 = vmatpush1.msra.mxu0 %v64
    %80 = vmatprep.subr.mxu0 %v63
    %81 = vmatpush1.msra.mxu0 %v62
    %82 = vmatprep.subr.mxu0 %v61
    %83 = vmatpush1.msra.mxu0 %v60
    %84 = vmatprep.subr.mxu0 %v59
    %85 = vmatpush1.msra.mxu0 %v58
    %86 = vmatprep.subr.mxu0 %v57
    %87 = vmatpush1.msra.mxu0 %v56
    %88 = vmatprep.subr.mxu0 %v55
    %89 = vmatpush1.msra.mxu0 %v54
    %90 = vmatprep.subr.mxu0 %v53
    %91 = vmatpush1.msra.mxu0 %v52
    %92 = vmatprep.subr.mxu0 %v51
    %93 = vmatpush1.msra.mxu0 %v50
    %94 = vmatprep.subr.mxu0 %v49
    %95 = vmatpush1.msra.mxu0 %v48
    %96 = vmatprep.subr.mxu0 %v47
    %97 = vmatpush1.msra.mxu0 %v46
    %98 = vmatprep.subr.mxu0 %v45
    %99 = vmatpush1.msra.mxu0 %v44
    %100 = vmatprep.subr.mxu0 %v43
    %101 = vmatpush1.msra.mxu0 %v42
    %102 = vmatprep.subr.mxu0 %v41
    %103 = vmatpush1.msra.mxu0 %v40
    %104 = vmatprep.subr.mxu0 %v39
    %105 = vmatpush1.msra.mxu0 %v38
    %106 = vmatprep.subr.mxu0 %v37
    %107 = vmatpush1.msra.mxu0 %v36
    %108 = vmatprep.subr.mxu0 %v35
    %109 = vmatpush1.msra.mxu0 %v34
    %110 = vmatprep.subr.mxu0 0.0
    %111 = vmatpush2.msra.mxu0 0.0
    %112 = vmatprep.subr.mxu0 0.0
    %113 = vmatpush2.msra.mxu0 0.0
    %114 = vmatprep.subr.mxu0 0.0
    %115 = vmatpush2.msra.mxu0 0.0
    %116 = vmatprep.subr.mxu0 0.0
    %117 = vmatpush2.msra.mxu0 0.0
    %118 = vmatprep.subr.mxu0 0.0
    %119 = vmatpush2.msra.mxu0 0.0
    %120 = vmatprep.subr.mxu0 0.0
    %121 = vmatpush2.msra.mxu0 0.0
    %122 = vmatprep.subr.mxu0 0.0
    %123 = vmatpush2.msra.mxu0 0.0
    %124 = vmatprep.subr.mxu0 0.0
    %125 = vmatpush2.msra.mxu0 0.0
    %126 = vmatprep.subr.mxu0 0.0
    %127 = vmatpush2.msra.mxu0 0.0
    %128 = vmatprep.subr.mxu0 0.0
    %129 = vmatpush2.msra.mxu0 0.0
    %130 = vmatprep.subr.mxu0 0.0
    %131 = vmatpush2.msra.mxu0 0.0
    %132 = vmatprep.subr.mxu0 0.0
    %133 = vmatpush2.msra.mxu0 0.0
    %134 = vmatprep.subr.mxu0 0.0
    %135 = vmatpush2.msra.mxu0 0.0
    %136 = vmatprep.subr.mxu0 0.0
    %137 = vmatpush2.msra.mxu0 0.0
    %138 = vmatprep.subr.mxu0 0.0
    %139 = vmatpush2.msra.mxu0 0.0
    %140 = vmatprep.subr.mxu0 0.0
    %141 = vmatpush2.msra.mxu0 0.0
    %142 = vmatprep.mubr.f32.mxu0 0.0
    %143 = vmatmul.mubr.f32.gmra.mxu0 %v33
    %v144 = vpop.f32.mrf.mxu0
    %v145 = vadd.f32 %v71, %v144
    %v146 = vpop.f32.mrf.mxu0
    %v147 = vadd.f32 %v75, %v146
    %148 = vdwg.mxu0
    %v149 = vmax.f32 %v145, 0.0
    %v150 = vmax.f32 %v147, 0.0
    %v151 = vld [vmem:[%s3] sm:$0xff]
    %v152 = vld [vmem:[%s3 + $0x8] sm:$0xff]
    %v153 = vld [vmem:[%s3 + $0x10] sm:$0xff]
    %v154 = vld [vmem:[%s3 + $0x18] sm:$0xff]
    %v155 = vld [vmem:[%s3 + $0x20] sm:$0xff]
    %v156 = vld [vmem:[%s3 + $0x28] sm:$0xff]
    %v157 = vld [vmem:[%s3 + $0x30] sm:$0xff]
    %v158 = vld [vmem:[%s3 + $0x38] sm:$0xff]
    %v159 = vld [vmem:[%s3 + $0x40] sm:$0xff]
    %v160 = vld [vmem:[%s3 + $0x48] sm:$0xff]
    %v161 = vld [vmem:[%s3 + $0x50] sm:$0xff]
    %v162 = vld [vmem:[%s3 + $0x58] sm:$0xff]
    %v163 = vld [vmem:[%s3 + $0x60] sm:$0xff]
    %v164 = vld [vmem:[%s3 + $0x68] sm:$0xff]
    %v165 = vld [vmem:[%s3 + $0x70] sm:$0xff]
    %v166 = vld [vmem:[%s3 + $0x78] sm:$0xff]
    %v167 = vld [vmem:[%s3 + $0x80] sm:$0xff]
    %v168 = vld [vmem:[%s3 + $0x88] sm:$0xff]
    %v169 = vld [vmem:[%s3 + $0x90] sm:$0xff]
    %v170 = vld [vmem:[%s3 + $0x98] sm:$0xff]
    %v171 = vld [vmem:[%s3 + $0xa0] sm:$0xff]
    %v172 = vld [vmem:[%s3 + $0xa8] sm:$0xff]
    %v173 = vld [vmem:[%s3 + $0xb0] sm:$0xff]
    %v174 = vld [vmem:[%s3 + $0xb8] sm:$0xff]
    %v175 = vld [vmem:[%s3 + $0xc0] sm:$0xff]
    %v176 = vld [vmem:[%s3 + $0xc8] sm:$0xff]
    %v177 = vld [vmem:[%s3 + $0xd0] sm:$0xff]
    %v178 = vld [vmem:[%s3 + $0xd8] sm:$0xff]
    %v179 = vld [vmem:[%s3 + $0xe0] sm:$0xff]
    %v180 = vld [vmem:[%s3 + $0xe8] sm:$0xff]
    %v181 = vld [vmem:[%s3 + $0xf0] sm:$0xff]
    %v182 = vld [vmem:[%s3 + $0xf8] sm:$0xff]
    %v183 = vld [vmem:[%s3 + $0x100] sm:$0xff]
    %v184 = vld [vmem:[%s3 + $0x108] sm:$0xff]
    %v185 = vld [vmem:[%s3 + $0x110] sm:$0xff]
    %v186 = vld [vmem:[%s3 + $0x118] sm:$0xff]
    %v187 = vld [vmem:[%s3 + $0x120] sm:$0xff]
    %v188 = vld [vmem:[%s3 + $0x128] sm:$0xff]
    %v189 = vld [vmem:[%s3 + $0x130] sm:$0xff]
    %v190 = vld [vmem:[%s3 + $0x138] sm:$0xff]
    %v191 = vld [vmem:[%s3 + $0x140] sm:$0xff]
    %v192 = vld [vmem:[%s3 + $0x148] sm:$0xff]
    %v193 = vld [vmem:[%s3 + $0x150] sm:$0xff]
    %v194 = vld [vmem:[%s3 + $0x158] sm:$0xff]
    %v195 = vld [vmem:[%s3 + $0x160] sm:$0xff]
    %v196 = vld [vmem:[%s3 + $0x168] sm:$0xff]
    %v197 = vld [vmem:[%s3 + $0x170] sm:$0xff]
    %v198 = vld [vmem:[%s3 + $0x178] sm:$0xff]
    %v199 = vld [vmem:[%s3 + $0x180] sm:$0xff]
    %v200 = vld [vmem:[%s3 + $0x188] sm:$0xff]
    %v201 = vld [vmem:[%s3 + $0x190] sm:$0xff]
    %v202 = vld [vmem:[%s3 + $0x198] sm:$0xff]
    %v203 = vld [vmem:[%s3 + $0x1a0] sm:$0xff]
    %v204 = vld [vmem:[%s3 + $0x1a8] sm:$0xff]
    %v205 = vld [vmem:[%s3 + $0x1b0] sm:$0xff]
    %v206 = vld [vmem:[%s3 + $0x1b8] sm:$0xff]
    %v207 = vld [vmem:[%s3 + $0x1c0] sm:$0xff]
    %v208 = vld [vmem:[%s3 + $0x1c8] sm:$0xff]
    %v209 = vld [vmem:[%s3 + $0x1d0] sm:$0xff]
    %v210 = vld [vmem:[%s3 + $0x1d8] sm:$0xff]
    %v211 = vld [vmem:[%s3 + $0x1e0] sm:$0xff]
    %v212 = vld [vmem:[%s3 + $0x1e8] sm:$0xff]
    %v213 = vld [vmem:[%s3 + $0x1f0] sm:$0xff]
    %v214 = vld [vmem:[%s3 + $0x1f8] sm:$0xff]
    %v215 = vld [vmem:[%s4] sm:$0x3]
    %v217 = vlaneseq
    %v218 = vshrl.u32 %v217, 7
    %v219 = vsub.s32 0, %v218
    %v220 = vrot.slane %v215, %v219
    %v221 = vlaneseq
    %v222 = vshrl.u32 %v221, 7
    %v223 = vsub.s32 1, %v222
    %v224 = vrot.slane %v215, %v223
    %227 = vmatprep.subr.mxu0 %v182
    %228 = vmatpush1.msra.mxu0 %v181
    %229 = vmatprep.subr.mxu0 %v180
    %230 = vmatpush1.msra.mxu0 %v179
    %231 = vmatprep.subr.mxu0 %v178
    %232 = vmatpush1.msra.mxu0 %v177
    %233 = vmatprep.subr.mxu0 %v176
    %234 = vmatpush1.msra.mxu0 %v175
    %235 = vmatprep.subr.mxu0 %v174
    %236 = vmatpush1.msra.mxu0 %v173
    %237 = vmatprep.subr.mxu0 %v172
    %238 = vmatpush1.msra.mxu0 %v171
    %239 = vmatprep.subr.mxu0 %v170
    %240 = vmatpush1.msra.mxu0 %v169
    %241 = vmatprep.subr.mxu0 %v168
    %242 = vmatpush1.msra.mxu0 %v167
    %243 = vmatprep.subr.mxu0 %v166
    %244 = vmatpush1.msra.mxu0 %v165
    %245 = vmatprep.subr.mxu0 %v164
    %246 = vmatpush1.msra.mxu0 %v163
    %247 = vmatprep.subr.mxu0 %v162
    %248 = vmatpush1.msra.mxu0 %v161
    %249 = vmatprep.subr.mxu0 %v160
    %250 = vmatpush1.msra.mxu0 %v159
    %251 = vmatprep.subr.mxu0 %v158
    %252 = vmatpush1.msra.mxu0 %v157
    %253 = vmatprep.subr.mxu0 %v156
    %254 = vmatpush1.msra.mxu0 %v155
    %255 = vmatprep.subr.mxu0 %v154
    %256 = vmatpush1.msra.mxu0 %v153
    %257 = vmatprep.subr.mxu0 %v152
    %258 = vmatpush1.msra.mxu0 %v151
    %259 = vmatprep.subr.mxu0 %v214
    %260 = vmatpush2.msra.mxu0 %v213
    %261 = vmatprep.subr.mxu0 %v212
    %262 = vmatpush2.msra.mxu0 %v211
    %263 = vmatprep.subr.mxu0 %v210
    %264 = vmatpush2.msra.mxu0 %v209
    %265 = vmatprep.subr.mxu0 %v208
    %266 = vmatpush2.msra.mxu0 %v207
    %267 = vmatprep.subr.mxu0 %v206
    %268 = vmatpush2.msra.mxu0 %v205
    %269 = vmatprep.subr.mxu0 %v204
    %270 = vmatpush2.msra.mxu0 %v203
    %271 = vmatprep.subr.mxu0 %v202
    %272 = vmatpush2.msra.mxu0 %v201
    %273 = vmatprep.subr.mxu0 %v200
    %274 = vmatpush2.msra.mxu0 %v199
    %275 = vmatprep.subr.mxu0 %v198
    %276 = vmatpush2.msra.mxu0 %v197
    %277 = vmatprep.subr.mxu0 %v196
    %278 = vmatpush2.msra.mxu0 %v195
    %279 = vmatprep.subr.mxu0 %v194
    %280 = vmatpush2.msra.mxu0 %v193
    %281 = vmatprep.subr.mxu0 %v192
    %282 = vmatpush2.msra.mxu0 %v191
    %283 = vmatprep.subr.mxu0 %v190
    %284 = vmatpush2.msra.mxu0 %v189
    %285 = vmatprep.subr.mxu0 %v188
    %286 = vmatpush2.msra.mxu0 %v187
    %287 = vmatprep.subr.mxu0 %v186
    %288 = vmatpush2.msra.mxu0 %v185
    %289 = vmatprep.subr.mxu0 %v184
    %290 = vmatpush2.msra.mxu0 %v183
    %291 = vmatprep.mubr.f32.mxu0 %v150
    %292 = vmatmul.mubr.f32.gmra.mxu0 %v149
    %v293 = vpop.f32.mrf.mxu0
    %v294 = vadd.f32 %v220, %v293
    %v295 = vpop.f32.mrf.mxu0
    %v296 = vadd.f32 %v224, %v295
    %297 = vdwg.mxu0
    %v298 = vmax.f32 %v294, 0.0
    %v299 = vmax.f32 %v296, 0.0
    %v300 = vld [vmem:[%s5] sm:$0xff]
    %v301 = vld [vmem:[%s5 + $0x8] sm:$0xff]
    %v302 = vld [vmem:[%s5 + $0x10] sm:$0xff]
    %v303 = vld [vmem:[%s5 + $0x18] sm:$0xff]
    %v304 = vld [vmem:[%s5 + $0x20] sm:$0xff]
    %v305 = vld [vmem:[%s5 + $0x28] sm:$0xff]
    %v306 = vld [vmem:[%s5 + $0x30] sm:$0xff]
    %v307 = vld [vmem:[%s5 + $0x38] sm:$0xff]
    %v308 = vld [vmem:[%s5 + $0x40] sm:$0xff]
    %v309 = vld [vmem:[%s5 + $0x48] sm:$0xff]
    %v310 = vld [vmem:[%s5 + $0x50] sm:$0xff]
    %v311 = vld [vmem:[%s5 + $0x58] sm:$0xff]
    %v312 = vld [vmem:[%s5 + $0x60] sm:$0xff]
    %v313 = vld [vmem:[%s5 + $0x68] sm:$0xff]
    %v314 = vld [vmem:[%s5 + $0x70] sm:$0xff]
    %v315 = vld [vmem:[%s5 + $0x78] sm:$0xff]
    %v316 = vld [vmem:[%s5 + $0x80] sm:$0xff]
    %v317 = vld [vmem:[%s5 + $0x88] sm:$0xff]
    %v318 = vld [vmem:[%s5 + $0x90] sm:$0xff]
    %v319 = vld [vmem:[%s5 + $0x98] sm:$0xff]
    %v320 = vld [vmem:[%s5 + $0xa0] sm:$0xff]
    %v321 = vld [vmem:[%s5 + $0xa8] sm:$0xff]
    %v322 = vld [vmem:[%s5 + $0xb0] sm:$0xff]
    %v323 = vld [vmem:[%s5 + $0xb8] sm:$0xff]
    %v324 = vld [vmem:[%s5 + $0xc0] sm:$0xff]
    %v325 = vld [vmem:[%s5 + $0xc8] sm:$0xff]
    %v326 = vld [vmem:[%s5 + $0xd0] sm:$0xff]
    %v327 = vld [vmem:[%s5 + $0xd8] sm:$0xff]
    %v328 = vld [vmem:[%s5 + $0xe0] sm:$0xff]
    %v329 = vld [vmem:[%s5 + $0xe8] sm:$0xff]
    %v330 = vld [vmem:[%s5 + $0xf0] sm:$0xff]
    %v331 = vld [vmem:[%s5 + $0xf8] sm:$0xff]
    %v332 = vld [vmem:[%s5 + $0x100] sm:$0xff]
    %v333 = vld [vmem:[%s5 + $0x108] sm:$0xff]
    %v334 = vld [vmem:[%s5 + $0x110] sm:$0xff]
    %v335 = vld [vmem:[%s5 + $0x118] sm:$0xff]
    %v336 = vld [vmem:[%s5 + $0x120] sm:$0xff]
    %v337 = vld [vmem:[%s5 + $0x128] sm:$0xff]
    %v338 = vld [vmem:[%s5 + $0x130] sm:$0xff]
    %v339 = vld [vmem:[%s5 + $0x138] sm:$0xff]
    %v340 = vld [vmem:[%s5 + $0x140] sm:$0xff]
    %v341 = vld [vmem:[%s5 + $0x148] sm:$0xff]
    %v342 = vld [vmem:[%s5 + $0x150] sm:$0xff]
    %v343 = vld [vmem:[%s5 + $0x158] sm:$0xff]
    %v344 = vld [vmem:[%s5 + $0x160] sm:$0xff]
    %v345 = vld [vmem:[%s5 + $0x168] sm:$0xff]
    %v346 = vld [vmem:[%s5 + $0x170] sm:$0xff]
    %v347 = vld [vmem:[%s5 + $0x178] sm:$0xff]
    %v348 = vld [vmem:[%s5 + $0x180] sm:$0xff]
    %v349 = vld [vmem:[%s5 + $0x188] sm:$0xff]
    %v350 = vld [vmem:[%s5 + $0x190] sm:$0xff]
    %v351 = vld [vmem:[%s5 + $0x198] sm:$0xff]
    %v352 = vld [vmem:[%s5 + $0x1a0] sm:$0xff]
    %v353 = vld [vmem:[%s5 + $0x1a8] sm:$0xff]
    %v354 = vld [vmem:[%s5 + $0x1b0] sm:$0xff]
    %v355 = vld [vmem:[%s5 + $0x1b8] sm:$0xff]
    %v356 = vld [vmem:[%s5 + $0x1c0] sm:$0xff]
    %v357 = vld [vmem:[%s5 + $0x1c8] sm:$0xff]
    %v358 = vld [vmem:[%s5 + $0x1d0] sm:$0xff]
    %v359 = vld [vmem:[%s5 + $0x1d8] sm:$0xff]
    %v360 = vld [vmem:[%s5 + $0x1e0] sm:$0xff]
    %v361 = vld [vmem:[%s5 + $0x1e8] sm:$0xff]
    %v362 = vld [vmem:[%s5 + $0x1f0] sm:$0xff]
    %v363 = vld [vmem:[%s5 + $0x1f8] sm:$0xff]
    %v364 = vld [vmem:[%s6] sm:$0x3]
    %v366 = vlaneseq
    %v367 = vshrl.u32 %v366, 7
    %v368 = vsub.s32 0, %v367
    %v369 = vrot.slane %v364, %v368
    %v370 = vlaneseq
    %v371 = vshrl.u32 %v370, 7
    %v372 = vsub.s32 1, %v371
    %v373 = vrot.slane %v364, %v372
    %376 = vmatprep.subr.mxu0 %v331
    %377 = vmatpush1.msra.mxu0 %v330
    %378 = vmatprep.subr.mxu0 %v329
    %379 = vmatpush1.msra.mxu0 %v328
    %380 = vmatprep.subr.mxu0 %v327
    %381 = vmatpush1.msra.mxu0 %v326
    %382 = vmatprep.subr.mxu0 %v325
    %383 = vmatpush1.msra.mxu0 %v324
    %384 = vmatprep.subr.mxu0 %v323
    %385 = vmatpush1.msra.mxu0 %v322
    %386 = vmatprep.subr.mxu0 %v321
    %387 = vmatpush1.msra.mxu0 %v320
    %388 = vmatprep.subr.mxu0 %v319
    %389 = vmatpush1.msra.mxu0 %v318
    %390 = vmatprep.subr.mxu0 %v317
    %391 = vmatpush1.msra.mxu0 %v316
    %392 = vmatprep.subr.mxu0 %v315
    %393 = vmatpush1.msra.mxu0 %v314
    %394 = vmatprep.subr.mxu0 %v313
    %395 = vmatpush1.msra.mxu0 %v312
    %396 = vmatprep.subr.mxu0 %v311
    %397 = vmatpush1.msra.mxu0 %v310
    %398 = vmatprep.subr.mxu0 %v309
    %399 = vmatpush1.msra.mxu0 %v308
    %400 = vmatprep.subr.mxu0 %v307
    %401 = vmatpush1.msra.mxu0 %v306
    %402 = vmatprep.subr.mxu0 %v305
    %403 = vmatpush1.msra.mxu0 %v304
    %404 = vmatprep.subr.mxu0 %v303
    %405 = vmatpush1.msra.mxu0 %v302
    %406 = vmatprep.subr.mxu0 %v301
    %407 = vmatpush1.msra.mxu0 %v300
    %408 = vmatprep.subr.mxu0 %v363
    %409 = vmatpush2.msra.mxu0 %v362
    %410 = vmatprep.subr.mxu0 %v361
    %411 = vmatpush2.msra.mxu0 %v360
    %412 = vmatprep.subr.mxu0 %v359
    %413 = vmatpush2.msra.mxu0 %v358
    %414 = vmatprep.subr.mxu0 %v357
    %415 = vmatpush2.msra.mxu0 %v356
    %416 = vmatprep.subr.mxu0 %v355
    %417 = vmatpush2.msra.mxu0 %v354
    %418 = vmatprep.subr.mxu0 %v353
    %419 = vmatpush2.msra.mxu0 %v352
    %420 = vmatprep.subr.mxu0 %v351
    %421 = vmatpush2.msra.mxu0 %v350
    %422 = vmatprep.subr.mxu0 %v349
    %423 = vmatpush2.msra.mxu0 %v348
    %424 = vmatprep.subr.mxu0 %v347
    %425 = vmatpush2.msra.mxu0 %v346
    %426 = vmatprep.subr.mxu0 %v345
    %427 = vmatpush2.msra.mxu0 %v344
    %428 = vmatprep.subr.mxu0 %v343
    %429 = vmatpush2.msra.mxu0 %v342
    %430 = vmatprep.subr.mxu0 %v341
    %431 = vmatpush2.msra.mxu0 %v340
    %432 = vmatprep.subr.mxu0 %v339
    %433 = vmatpush2.msra.mxu0 %v338
    %434 = vmatprep.subr.mxu0 %v337
    %435 = vmatpush2.msra.mxu0 %v336
    %436 = vmatprep.subr.mxu0 %v335
    %437 = vmatpush2.msra.mxu0 %v334
    %438 = vmatprep.subr.mxu0 %v333
    %439 = vmatpush2.msra.mxu0 %v332
    %440 = vmatprep.mubr.f32.mxu0 %v299
    %441 = vmatmul.mubr.f32.gmra.mxu0 %v298
    %v442 = vpop.f32.mrf.mxu0
    %v443 = vadd.f32 %v369, %v442
    %v444 = vpop.f32.mrf.mxu0
    %v445 = vadd.f32 %v373, %v444
    %446 = vdwg.mxu0
    %v447 = vmax.f32 %v443, 0.0
    %v448 = vmax.f32 %v445, 0.0
    %v449 = vld [vmem:[%s7] sm:$0xff]
    %v450 = vld [vmem:[%s7 + $0x8] sm:$0xff]
    %v451 = vld [vmem:[%s7 + $0x10] sm:$0xff]
    %v452 = vld [vmem:[%s7 + $0x18] sm:$0xff]
    %v453 = vld [vmem:[%s7 + $0x20] sm:$0xff]
    %v454 = vld [vmem:[%s7 + $0x28] sm:$0xff]
    %v455 = vld [vmem:[%s7 + $0x30] sm:$0xff]
    %v456 = vld [vmem:[%s7 + $0x38] sm:$0xff]
    %v457 = vld [vmem:[%s7 + $0x40] sm:$0xff]
    %v458 = vld [vmem:[%s7 + $0x48] sm:$0xff]
    %v459 = vld [vmem:[%s7 + $0x50] sm:$0xff]
    %v460 = vld [vmem:[%s7 + $0x58] sm:$0xff]
    %v461 = vld [vmem:[%s7 + $0x60] sm:$0xff]
    %v462 = vld [vmem:[%s7 + $0x68] sm:$0xff]
    %v463 = vld [vmem:[%s7 + $0x70] sm:$0xff]
    %v464 = vld [vmem:[%s7 + $0x78] sm:$0xff]
    %v465 = vld [vmem:[%s7 + $0x80] sm:$0xff]
    %v466 = vld [vmem:[%s7 + $0x88] sm:$0xff]
    %v467 = vld [vmem:[%s7 + $0x90] sm:$0xff]
    %v468 = vld [vmem:[%s7 + $0x98] sm:$0xff]
    %v469 = vld [vmem:[%s7 + $0xa0] sm:$0xff]
    %v470 = vld [vmem:[%s7 + $0xa8] sm:$0xff]
    %v471 = vld [vmem:[%s7 + $0xb0] sm:$0xff]
    %v472 = vld [vmem:[%s7 + $0xb8] sm:$0xff]
    %v473 = vld [vmem:[%s7 + $0xc0] sm:$0xff]
    %v474 = vld [vmem:[%s7 + $0xc8] sm:$0xff]
    %v475 = vld [vmem:[%s7 + $0xd0] sm:$0xff]
    %v476 = vld [vmem:[%s7 + $0xd8] sm:$0xff]
    %v477 = vld [vmem:[%s7 + $0xe0] sm:$0xff]
    %v478 = vld [vmem:[%s7 + $0xe8] sm:$0xff]
    %v479 = vld [vmem:[%s7 + $0xf0] sm:$0xff]
    %v480 = vld [vmem:[%s7 + $0xf8] sm:$0xff]
    %v481 = vld [vmem:[%s8] sm:$0x1]
    %v483 = vlaneseq
    %v484 = vshrl.u32 %v483, 7
    %v485 = vsub.s32 0, %v484
    %v486 = vrot.slane %v481, %v485
    %488 = vmatprep.subr.mxu0 0.0
    %489 = vmatpush1.msra.mxu0 %v464
    %490 = vmatprep.subr.mxu0 0.0
    %491 = vmatpush1.msra.mxu0 %v463
    %492 = vmatprep.subr.mxu0 0.0
    %493 = vmatpush1.msra.mxu0 %v462
    %494 = vmatprep.subr.mxu0 0.0
    %495 = vmatpush1.msra.mxu0 %v461
    %496 = vmatprep.subr.mxu0 0.0
    %497 = vmatpush1.msra.mxu0 %v460
    %498 = vmatprep.subr.mxu0 0.0
    %499 = vmatpush1.msra.mxu0 %v459
    %500 = vmatprep.subr.mxu0 0.0
    %501 = vmatpush1.msra.mxu0 %v458
    %502 = vmatprep.subr.mxu0 0.0
    %503 = vmatpush1.msra.mxu0 %v457
    %504 = vmatprep.subr.mxu0 0.0
    %505 = vmatpush1.msra.mxu0 %v456
    %506 = vmatprep.subr.mxu0 0.0
    %507 = vmatpush1.msra.mxu0 %v455
    %508 = vmatprep.subr.mxu0 0.0
    %509 = vmatpush1.msra.mxu0 %v454
    %510 = vmatprep.subr.mxu0 0.0
    %511 = vmatpush1.msra.mxu0 %v453
    %512 = vmatprep.subr.mxu0 0.0
    %513 = vmatpush1.msra.mxu0 %v452
    %514 = vmatprep.subr.mxu0 0.0
    %515 = vmatpush1.msra.mxu0 %v451
    %516 = vmatprep.subr.mxu0 0.0
    %517 = vmatpush1.msra.mxu0 %v450
    %518 = vmatprep.subr.mxu0 0.0
    %519 = vmatpush1.msra.mxu0 %v449
    %520 = vmatprep.subr.mxu0 0.0
    %521 = vmatpush2.msra.mxu0 %v480
    %522 = vmatprep.subr.mxu0 0.0
    %523 = vmatpush2.msra.mxu0 %v479
    %524 = vmatprep.subr.mxu0 0.0
    %525 = vmatpush2.msra.mxu0 %v478
    %526 = vmatprep.subr.mxu0 0.0
    %527 = vmatpush2.msra.mxu0 %v477
    %528 = vmatprep.subr.mxu0 0.0
    %529 = vmatpush2.msra.mxu0 %v476
    %530 = vmatprep.subr.mxu0 0.0
    %531 = vmatpush2.msra.mxu0 %v475
    %532 = vmatprep.subr.mxu0 0.0
    %533 = vmatpush2.msra.mxu0 %v474
    %534 = vmatprep.subr.mxu0 0.0
    %535 = vmatpush2.msra.mxu0 %v473
    %536 = vmatprep.subr.mxu0 0.0
    %537 = vmatpush2.msra.mxu0 %v472
    %538 = vmatprep.subr.mxu0 0.0
    %539 = vmatpush2.msra.mxu0 %v471
    %540 = vmatprep.subr.mxu0 0.0
    %541 = vmatpush2.msra.mxu0 %v470
    %542 = vmatprep.subr.mxu0 0.0
    %543 = vmatpush2.msra.mxu0 %v469
    %544 = vmatprep.subr.mxu0 0.0
    %545 = vmatpush2.msra.mxu0 %v468
    %546 = vmatprep.subr.mxu0 0.0
    %547 = vmatpush2.msra.mxu0 %v467
    %548 = vmatprep.subr.mxu0 0.0
    %549 = vmatpush2.msra.mxu0 %v466
    %550 = vmatprep.subr.mxu0 0.0
    %551 = vmatpush2.msra.mxu0 %v465
    %552 = vmatprep.mubr.f32.mxu0 %v448
    %553 = vmatmul.mubr.f32.gmra.mxu0 %v447
    %v554 = vpop.f32.mrf.mxu0
    %v555 = vadd.f32 %v486, %v554
    %v556 = vpop.f32.mrf.mxu0
    %557 = vdwg.mxu0
    %v558 = vtanh.pop %v555
    %559 = vst [vmem:[#allocation2] sm:$0xff] %v558
    // Predicated region
    $region38: #{actor_forward.1} parent=1 // pred_check
      _
    $region39: #{actor_forward.1} parent=1 // pred_check_branch
      %561 = sbr.rel (0) target = $region41
    $region40: #{actor_forward.1} parent=1 // pred_region
      %s563 = ssub.s32 128, 128
      %564 = vsyncadd [#allocation3], %s563
      %s566 = sshll.u32 [#allocation2], 4
      %s567 = int_to_ptr.vmem [resolvable:$true] %s566
      %569 = dma.vmem_to_hbm [thread:$0]  %s567, 128, %s9, [#allocation3]
    $region41: #{actor_forward.1} parent=1 // pred_fallthru
      _
    // Predicated region
    $region42: #{actor_forward.1} parent=1 // pred_check
      _
    $region43: #{actor_forward.1} parent=1 // pred_check_branch
      %571 = sbr.rel (0) target = $region45
    $region44: #{actor_forward.1} parent=1 // pred_region
      %572 = dma.done [#allocation3], 128
    $region45: #{actor_forward.1} parent=1 // pred_fallthru
      _
    %573 = vsyncpa [#allocation3], 1

</llo_original>
